<compile_context>
chip_gen: v5e
topology: v5e:2x2
jax: 0.10.0
libtpu: 0.0.40
codegen_flags: <defaults>
</compile_context>

<pallas_src>
import jax
import jax.numpy as jnp
import numpy as np
from jax.experimental import pallas as pl
from jax.experimental.pallas import tpu as pltpu


# ----------------------------- Pallas kernel ------------------------------ #

def _circuit_kernel(x_ref, gdiff_ref, scat_ref, out_ref, acc_ref):
    # x_ref:     (B_tile, N_pad)  node voltages (ground dropped, zero-padded)
    # gdiff_ref: (N_pad, D_tile)  fused gather:  g * (onehot(src) - onehot(des))
    # scat_ref:  (D_tile, N_pad)  signed incidence (-1 at src node, +1 at des node)
    # out_ref:   (B_tile, N_pad)  net injected current per (non-ground) node
    # acc_ref:   (B_tile, N_pad)  f32 accumulator, resident across the D grid axis
    @pl.when(pl.program_id(1) == 0)
    def _init():
        acc_ref[...] = jnp.zeros_like(acc_ref)

    # Device current law (assumed): i = tanh(g * (v_src - v_des)) == tanh(x @ gdiff)
    i_dev = jnp.tanh(jnp.dot(x_ref[...], gdiff_ref[...],
                             preferred_element_type=jnp.float32))
    acc_ref[...] += jnp.dot(i_dev.astype(scat_ref.dtype), scat_ref[...],
                            preferred_element_type=jnp.float32)

    @pl.when(pl.program_id(1) == pl.num_programs(1) - 1)
    def _finalize():
        out_ref[...] = acc_ref[...].astype(out_ref.dtype)


# ----------------------- host-side topology matrices ----------------------- #

_TOPO_CACHE = {}


def _round_up(v, m):
    return ((v + m - 1) // m) * m


def _topology_matrices(src, des, g, n, n_pad, d_pad, dtype):
    """Build (and cache) the fused gather matrix and signed incidence matrix."""
    key = (src.tobytes(), des.tobytes(), g.tobytes(), n, n_pad, d_pad,
           np.dtype(dtype).name)
    cached = _TOPO_CACHE.get(key)
    if cached is not None:
        return cached

    d = src.shape[0]
    dev = np.arange(d)
    src_m = src > 0          # ground (node 0) terminals contribute 0 volts / 0 current
    des_m = des > 0

    # Fused gather: column k is g[k] * (onehot(src[k]) - onehot(des[k])), ground row
    # dropped (it would multiply the implicit 0-volt ground node).
    gdiff = np.zeros((n_pad, d_pad), dtype=np.float32)
    gdiff[src[src_m] - 1, dev[src_m]] += g[src_m]
    gdiff[des[des_m] - 1, dev[des_m]] -= g[des_m]

    # Signed incidence / scatter matrix (ground column dropped, == result[..., 1:]).
    scat = np.zeros((d_pad, n_pad), dtype=np.float32)
    scat[dev[src_m], src[src_m] - 1] -= 1.0
    scat[dev[des_m], des[des_m] - 1] += 1.0

    out = (jnp.asarray(gdiff, dtype=dtype), jnp.asarray(scat, dtype=dtype))
    _TOPO_CACHE[key] = out
    return out


# ------------------------------ forward wrapper ----------------------------- #

def circuit_forward(t, x, src_node, des_node, g, *, use_bf16=False):
    """JAX/Pallas equivalent of Circuit.forward.

    Args:
      t:        scalar time (unused by the assumed device law; kept for parity).
      x:        (batch, num_nodes) node voltages (node 0 = ground is implicit).
      src_node: (num_device,) int source node indices (0 == ground).
      des_node: (num_device,) int destination node indices.
      g:        (num_device,) per-device conductance.
      use_bf16: use bf16 MXU operands (v6e / v7x fast path); accumulation is f32.

    Returns:
      (batch, num_nodes) float32 net current injected into each non-ground node.
    """
    del t  # time is not used by the assumed device model
    b, n = x.shape
    d = int(src_node.shape[0])

    op_dtype = jnp.bfloat16 if use_bf16 else jnp.float32
    op_size = 2 if use_bf16 else 4

    # --- pad / tile geometry (lane-dense, MXU-aligned) ----------------------- #
    n_pad = _round_up(n, 128)           # node dim: lanes of x/out, MXU K & N
    d_pad = _round_up(d, 128)           # device dim: MXU N (gather) / K (scatter)
    sub = 16 if use_bf16 else 8         # sublane quantum for the operand dtype
    b_tile = min(_round_up(b, sub), 128)
    b_pad = _round_up(b, b_tile)
    d_tile = min(d_pad, 256)            # reduction-axis tile

    src = np.asarray(src_node, dtype=np.int64)
    des = np.asarray(des_node, dtype=np.int64)
    g_np = np.asarray(g, dtype=np.float32)
    gdiff, scat = _topology_matrices(src, des, g_np, n, n_pad, d_pad, op_dtype)

    x_p = jnp.zeros((b_pad, n_pad), dtype=op_dtype)
    x_p = x_p.at[:b, :n].set(x.astype(op_dtype))

    # --- explicit VMEM budget (double-buffered inputs + f32 accumulator) ----- #
    step_bytes = (b_tile * n_pad * op_size        # x tile
                  + n_pad * d_tile * op_size      # gdiff tile
                  + d_tile * n_pad * op_size      # scat tile
                  + b_tile * n_pad * 4)           # out tile (f32)
    acc_bytes = b_tile * n_pad * 4
    vmem_limit = int(min(max(2 * step_bytes + acc_bytes + (8 << 20), 16 << 20),
                         32 << 20))

    grid = (b_pad // b_tile, d_pad // d_tile)

    out = pl.pallas_call(
        _circuit_kernel,
        out_shape=jax.ShapeDtypeStruct((b_pad, n_pad), jnp.float32),
        grid_spec=pltpu.PrefetchScalarGridSpec(
            num_scalar_prefetch=0,
            grid=grid,
            in_specs=[
                pl.BlockSpec((b_tile, n_pad), lambda i, k: (i, 0)),   # x
                pl.BlockSpec((n_pad, d_tile), lambda i, k: (0, k)),   # gdiff
                pl.BlockSpec((d_tile, n_pad), lambda i, k: (k, 0)),   # scat
            ],
            out_specs=pl.BlockSpec((b_tile, n_pad), lambda i, k: (i, 0)),
            scratch_shapes=[pltpu.VMEM((b_tile, n_pad), jnp.float32)],
        ),
        compiler_params=pltpu.CompilerParams(
            dimension_semantics=("parallel", "arbitrary"),
            vmem_limit_bytes=vmem_limit,
        ),
    )(x_p, gdiff, scat)

    return out[:b, :n]


# ------------------------- pure-JAX reference ------------------------------ #

def circuit_reference(t, x, src_node, des_node, g):
    del t
    src = jnp.asarray(src_node, dtype=jnp.int32)
    des = jnp.asarray(des_node, dtype=jnp.int32)
    aux_v = jnp.concatenate([jnp.zeros_like(x[..., :1]), x], axis=-1)
    v_src = aux_v[..., src]
    v_des = aux_v[..., des]
    state_i = jnp.tanh(g[None, :] * (v_src - v_des))
    result = jnp.zeros_like(aux_v)
    b = x.shape[0]
    batch_idx = jnp.arange(b)[:, None]
    result = result.at[batch_idx, src[None, :]].add(-state_i)
    result = result.at[batch_idx, des[None, :]].add(state_i)
    return result[..., 1:]


# --------------------------------- main ------------------------------------ #

if __name__ == "__main__":
    key = jax.random.PRNGKey(0)
    k_x, k_g = jax.random.split(key)

    batch = 8
    num_nodes = 8        # non-ground nodes; ground is node 0
    num_device = 16

    # Deterministic synthetic topology: devices connect node i -> node (i+1) mod
    # (num_nodes+1), covering both ground-connected and internal edges.
    src_node = np.arange(num_device, dtype=np.int64) % (num_nodes + 1)
    des_node = (np.arange(num_device, dtype=np.int64) + 1) % (num_nodes + 1)

    x = jax.random.normal(k_x, (batch, num_nodes), dtype=jnp.float32)
    g = jax.random.uniform(k_g, (num_device,), dtype=jnp.float32,
                           minval=0.5, maxval=1.5)

    t = 0.0
    ref = circuit_reference(t, x, src_node, des_node, g)

    # float32 path: bit-for-bit comparable to the reference.
    out_f32 = jax.block_until_ready(circuit_forward(t, x, src_node, des_node, g))
    np.testing.assert_allclose(np.asarray(out_f32), np.asarray(ref),
                               rtol=1e-5, atol=1e-5)

    # bf16 MXU-operand path (v6e / v7x fast path): f32 accumulation, loose check.
    out_bf16 = jax.block_until_ready(
        circuit_forward(t, x, src_node, des_node, g, use_bf16=True))
    np.testing.assert_allclose(np.asarray(out_bf16), np.asarray(ref),
                               rtol=1e-1, atol=1e-1)

    print("KERNEL_OK")
</pallas_src>

<mosaic_0001>
module attributes {stable_mosaic.version = 11 : i64} {
  func.func @_circuit_kernel(%arg0: i32, %arg1: i32, %arg2: memref<8x128xf32, #tpu.memory_space<vmem>>, %arg3: memref<128x128xf32, #tpu.memory_space<vmem>>, %arg4: memref<128x128xf32, #tpu.memory_space<vmem>>, %arg5: memref<8x128xf32, #tpu.memory_space<vmem>>, %arg6: memref<8x128xf32, #tpu.memory_space<vmem>>) attributes {dimension_semantics = [#tpu.dimension_semantics<parallel>, #tpu.dimension_semantics<arbitrary>], iteration_bounds = array<i64: 1, 1>, scalar_prefetch = 0 : i64, scratch_operands = 1 : i64, tpu.core_type = #tpu.core_type<tc>, window_params = [{transform_indices = @transform_0, window_bounds = array<i64: 8, 128>}, {transform_indices = @transform_1, window_bounds = array<i64: 128, 128>}, {transform_indices = @transform_2, window_bounds = array<i64: 128, 128>}, {transform_indices = @transform_3, window_bounds = array<i64: 8, 128>}]} {
    %c0_i32 = arith.constant 0 : i32
    %0 = arith.cmpi eq, %arg1, %c0_i32 : i32
    %1 = arith.extui %0 : i1 to i32
    %c0_i32_0 = arith.constant 0 : i32
    %2 = arith.cmpi ne, %1, %c0_i32_0 : i32
    scf.if %2 {
      %cst_13 = arith.constant 0.000000e+00 : f32
      %15 = vector.broadcast %cst_13 : f32 to vector<8x128xf32>
      %c0_14 = arith.constant 0 : index
      %c0_15 = arith.constant 0 : index
      %16 = vector.load %arg6[%c0_14, %c0_15] : memref<8x128xf32, #tpu.memory_space<vmem>>, vector<8x128xf32>
      tpu.vector_store %arg6[%c0_14, %c0_15], %15 {strides = array<i32>} : memref<8x128xf32, #tpu.memory_space<vmem>>, vector<8x128xf32>,
    } else {
    }
    %c0 = arith.constant 0 : index
    %c0_1 = arith.constant 0 : index
    %3 = vector.load %arg2[%c0, %c0_1] : memref<8x128xf32, #tpu.memory_space<vmem>>, vector<8x128xf32>
    %c0_2 = arith.constant 0 : index
    %c0_3 = arith.constant 0 : index
    %4 = vector.load %arg3[%c0_2, %c0_3] : memref<128x128xf32, #tpu.memory_space<vmem>>, vector<128x128xf32>
    %cst = arith.constant dense<0.000000e+00> : vector<8x128xf32>
    %5 = tpu.matmul %3, %4, %cst {dimension_numbers = #tpu.dot_dimension_numbers<[1], [0], [0], [1], [0, 0, 1, 1], [], []>} : vector<8x128xf32>, vector<128x128xf32>, vector<8x128xf32> -> vector<8x128xf32>
    %6 = math.tanh %5 : vector<8x128xf32>
    %c0_4 = arith.constant 0 : index
    %c0_5 = arith.constant 0 : index
    %7 = vector.load %arg6[%c0_4, %c0_5] : memref<8x128xf32, #tpu.memory_space<vmem>>, vector<8x128xf32>
    %c0_6 = arith.constant 0 : index
    %c0_7 = arith.constant 0 : index
    %8 = vector.load %arg4[%c0_6, %c0_7] : memref<128x128xf32, #tpu.memory_space<vmem>>, vector<128x128xf32>
    %cst_8 = arith.constant dense<0.000000e+00> : vector<8x128xf32>
    %9 = tpu.matmul %6, %8, %cst_8 {dimension_numbers = #tpu.dot_dimension_numbers<[1], [0], [0], [1], [0, 0, 1, 1], [], []>} : vector<8x128xf32>, vector<128x128xf32>, vector<8x128xf32> -> vector<8x128xf32>
    %10 = arith.addf %7, %9 : vector<8x128xf32>
    %c0_9 = arith.constant 0 : index
    %c0_10 = arith.constant 0 : index
    %11 = vector.load %arg6[%c0_9, %c0_10] : memref<8x128xf32, #tpu.memory_space<vmem>>, vector<8x128xf32>
    tpu.vector_store %arg6[%c0_9, %c0_10], %10 {strides = array<i32>} : memref<8x128xf32, #tpu.memory_space<vmem>>, vector<8x128xf32>,
    %c0_i32_11 = arith.constant 0 : i32
    %12 = arith.cmpi eq, %arg1, %c0_i32_11 : i32
    %13 = arith.extui %12 : i1 to i32
    %c0_i32_12 = arith.constant 0 : i32
    %14 = arith.cmpi ne, %13, %c0_i32_12 : i32
    scf.if %14 {
      %c0_13 = arith.constant 0 : index
      %c0_14 = arith.constant 0 : index
      %15 = vector.load %arg6[%c0_13, %c0_14] : memref<8x128xf32, #tpu.memory_space<vmem>>, vector<8x128xf32>
      %c0_15 = arith.constant 0 : index
      %c0_16 = arith.constant 0 : index
      %16 = vector.load %arg5[%c0_15, %c0_16] : memref<8x128xf32, #tpu.memory_space<vmem>>, vector<8x128xf32>
      tpu.vector_store %arg5[%c0_15, %c0_16], %15 {strides = array<i32>} : memref<8x128xf32, #tpu.memory_space<vmem>>, vector<8x128xf32>,
    } else {
    }
    return
  }
  func.func @transform_0(%arg0: i32, %arg1: i32) -> (i32, i32) {
    %c0_i32 = arith.constant 0 : i32
    %c0_i32_0 = arith.constant 0 : i32
    return %arg0, %c0_i32 : i32, i32
  }
  func.func @transform_1(%arg0: i32, %arg1: i32) -> (i32, i32) {
    %c0_i32 = arith.constant 0 : i32
    %c0_i32_0 = arith.constant 0 : i32
    return %c0_i32, %arg1 : i32, i32
  }
  func.func @transform_2(%arg0: i32, %arg1: i32) -> (i32, i32) {
    %c0_i32 = arith.constant 0 : i32
    %c0_i32_0 = arith.constant 0 : i32
    return %arg1, %c0_i32 : i32, i32
  }
  func.func @transform_3(%arg0: i32, %arg1: i32) -> (i32, i32) {
    %c0_i32 = arith.constant 0 : i32
    %c0_i32_0 = arith.constant 0 : i32
    return %arg0, %c0_i32 : i32, i32
  }
}

</mosaic_0001>

<llo_original>
// kernel: tpu_custom_call.1
$region0: #{tpu_custom_call.1}
  #allocation0 [shape = 'u32[]', space=smem, size = 0x4, offset = 0x4, fixed_abs, tag = 'smem constant byte address 0x4 - core index']
  #allocation1 [shape = 'u32[72,128]{1,0:T(1,128)}', space=vmem, size = 0x9000, scoped, tag = 'internal scratch']
  #allocation2 [shape = 'f32[8,128]{1,0:T(8,128)}', space=vmem, size = 0x1000, scoped, tag = 'scratch operand']
  %s0 = inlined_call_operand.hbm [shape: f32[8,128], index: 0, kind: input, shape index: {}]
  %s1 = inlined_call_operand.hbm [shape: f32[128,128], index: 1, kind: input, shape index: {}]
  %s2 = inlined_call_operand.hbm [shape: f32[128,128], index: 2, kind: input, shape index: {}]
  %s3 = inlined_call_operand.hbm [shape: f32[8,128], index: 3, kind: output, shape index: {}]
  %s4 = sld [smem:[#allocation0]]
  $region42: #{tpu_custom_call.1} parent=0
    _
  %s6 = ssub.s32 1, %s4
  %s7 = scalar_select 0, %s6, %s4
  $region1: #{tpu_custom_call.1} parent=0
    #allocation3 [shape = 'u8[4096]{0}', space=vmem, size = 0x1000, scoped, tag = 'input window, operand 0, single buffered']
    #allocation4 [shape = 's32[1]{0}', space=sflag, size = 0x4, scoped, tag = 'scoped memory for tpu_custom_call.1']
    #allocation5 [shape = 's32[1]{0}', space=sflag, size = 0x4, scoped, tag = 'scoped memory for tpu_custom_call.1']
    #allocation6 [shape = 'u8[65536]{0}', space=vmem, size = 0x10000, scoped, tag = 'input window, operand 1, single buffered']
    #allocation7 [shape = 's32[1]{0}', space=sflag, size = 0x4, scoped, tag = 'scoped memory for tpu_custom_call.1']
    #allocation8 [shape = 'u8[65536]{0}', space=vmem, size = 0x10000, scoped, tag = 'input window, operand 2, single buffered']
    #allocation9 [shape = 'u8[4096]{0}', space=vmem, size = 0x1000, scoped, tag = 'output window, operand 0, single buffered']
    %8 = vsyncpa [#allocation4], 0
    %9 = vsyncpa [#allocation7], 0
    %10 = vsyncpa [#allocation5], 0
    // Predicated region
    $region2: #{tpu_custom_call.1} parent=1 // pred_check
      _
    $region3: #{tpu_custom_call.1} parent=1 // pred_check_branch
      %12 = sbr.rel (0) target = $region5
    $region4: #{tpu_custom_call.1} parent=1 // pred_region
      %14 = vsyncadd [#allocation4], 0
      %s16 = sshll.u32 %s0, 4
      %s17 = int_to_ptr.hbm [resolvable:$true] %s16
      %s18 = sshll.u32 [#allocation3], 4
      %s19 = int_to_ptr.vmem [resolvable:$true] %s18
      %21 = dma.hbm_to_vmem [thread:$0]  %s17, 128, %s19, [#allocation4]
    $region5: #{tpu_custom_call.1} parent=1 // pred_fallthru
      _
    // Predicated region
    $region6: #{tpu_custom_call.1} parent=1 // pred_check
      _
    $region7: #{tpu_custom_call.1} parent=1 // pred_check_branch
      %23 = sbr.rel (0) target = $region9
    $region8: #{tpu_custom_call.1} parent=1 // pred_region
      %25 = vsyncadd [#allocation7], 0
      %s26 = sshll.u32 %s1, 4
      %s27 = int_to_ptr.hbm [resolvable:$true] %s26
      %s28 = sshll.u32 [#allocation6], 4
      %s29 = int_to_ptr.vmem [resolvable:$true] %s28
      %34 = dma.hbm_to_vmem [thread:$0]  %s27, 2048, %s29, [#allocation7], 128, 128, 8
    $region9: #{tpu_custom_call.1} parent=1 // pred_fallthru
      _
    // Predicated region
    $region10: #{tpu_custom_call.1} parent=1 // pred_check
      _
    $region11: #{tpu_custom_call.1} parent=1 // pred_check_branch
      %36 = sbr.rel (0) target = $region13
    $region12: #{tpu_custom_call.1} parent=1 // pred_region
      %38 = vsyncadd [#allocation7], 0
      %s39 = sshll.u32 %s2, 4
      %s40 = int_to_ptr.hbm [resolvable:$true] %s39
      %s41 = sshll.u32 [#allocation8], 4
      %s42 = int_to_ptr.vmem [resolvable:$true] %s41
      %47 = dma.hbm_to_vmem [thread:$0]  %s40, 2048, %s42, [#allocation7], 128, 128, 8
    $region13: #{tpu_custom_call.1} parent=1 // pred_fallthru
      _
    // Predicated region
    $region14: #{tpu_custom_call.1} parent=1 // pred_check
      _
    $region15: #{tpu_custom_call.1} parent=1 // pred_check_branch
      %49 = sbr.rel (0) target = $region17
    $region16: #{tpu_custom_call.1} parent=1 // pred_region
      %51 = dma.done [#allocation4], 128
    $region17: #{tpu_custom_call.1} parent=1 // pred_fallthru
      _
    // Predicated region
    $region18: #{tpu_custom_call.1} parent=1 // pred_check
      _
    $region19: #{tpu_custom_call.1} parent=1 // pred_check_branch
      %53 = sbr.rel (0) target = $region21
    $region20: #{tpu_custom_call.1} parent=1 // pred_region
      %55 = dma.done [#allocation7], 2048
    $region21: #{tpu_custom_call.1} parent=1 // pred_fallthru
      _
    // Predicated region
    $region22: #{tpu_custom_call.1} parent=1 // pred_check
      _
    $region23: #{tpu_custom_call.1} parent=1 // pred_check_branch
      %57 = sbr.rel (0) target = $region25
    $region24: #{tpu_custom_call.1} parent=1 // pred_region
      %59 = dma.done [#allocation7], 2048
    $region25: #{tpu_custom_call.1} parent=1 // pred_fallthru
      _
    %p60 = scmp.eq.s32.totalorder 0, 0
    // Predicated region
    $region26: #{tpu_custom_call.1} parent=1 // pred_check
      %p61 = pneg %p60
    $region27: #{tpu_custom_call.1} parent=1 // pred_check_branch
      %63 = sbr.rel (%p61) target = $region29
    $region28: #{tpu_custom_call.1} parent=1 // pred_region
      %64 = vst [vmem:[#allocation2] sm:$0xff] 0.0
    $region29: #{tpu_custom_call.1} parent=1 // pred_fallthru
      _
    %v65 = vld [vmem:[#allocation3] sm:$0xff]
    %v66 = vld [vmem:[#allocation6] sm:$0xff]
    %v67 = vld [vmem:[#allocation6 + $0x8] sm:$0xff]
    %v68 = vld [vmem:[#allocation6 + $0x10] sm:$0xff]
    %v69 = vld [vmem:[#allocation6 + $0x18] sm:$0xff]
    %v70 = vld [vmem:[#allocation6 + $0x20] sm:$0xff]
    %v71 = vld [vmem:[#allocation6 + $0x28] sm:$0xff]
    %v72 = vld [vmem:[#allocation6 + $0x30] sm:$0xff]
    %v73 = vld [vmem:[#allocation6 + $0x38] sm:$0xff]
    %v74 = vld [vmem:[#allocation6 + $0x40] sm:$0xff]
    %v75 = vld [vmem:[#allocation6 + $0x48] sm:$0xff]
    %v76 = vld [vmem:[#allocation6 + $0x50] sm:$0xff]
    %v77 = vld [vmem:[#allocation6 + $0x58] sm:$0xff]
    %v78 = vld [vmem:[#allocation6 + $0x60] sm:$0xff]
    %v79 = vld [vmem:[#allocation6 + $0x68] sm:$0xff]
    %v80 = vld [vmem:[#allocation6 + $0x70] sm:$0xff]
    %v81 = vld [vmem:[#allocation6 + $0x78] sm:$0xff]
    %82 = vmatpush.msra.mxu0 %v81
    %83 = vmatpush.msra.mxu0 %v80
    %84 = vmatpush.msra.mxu0 %v79
    %85 = vmatpush.msra.mxu0 %v78
    %86 = vmatpush.msra.mxu0 %v77
    %87 = vmatpush.msra.mxu0 %v76
    %88 = vmatpush.msra.mxu0 %v75
    %89 = vmatpush.msra.mxu0 %v74
    %90 = vmatpush.msra.mxu0 %v73
    %91 = vmatpush.msra.mxu0 %v72
    %92 = vmatpush.msra.mxu0 %v71
    %93 = vmatpush.msra.mxu0 %v70
    %94 = vmatpush.msra.mxu0 %v69
    %95 = vmatpush.msra.mxu0 %v68
    %96 = vmatpush.msra.mxu0 %v67
    %97 = vmatpush.msra.mxu0 %v66
    %98 = vmatmul.f32.gmra.mxu0 %v65
    %v99 = vpop.f32.mrf.mxu0
    %v100 = vadd.f32 0.0, %v99
    %101 = vdwg.mxu0
    %v102 = vtanh.pop %v100
    %v103 = vld [vmem:[#allocation2] sm:$0xff]
    %v104 = vld [vmem:[#allocation8] sm:$0xff]
    %v105 = vld [vmem:[#allocation8 + $0x8] sm:$0xff]
    %v106 = vld [vmem:[#allocation8 + $0x10] sm:$0xff]
    %v107 = vld [vmem:[#allocation8 + $0x18] sm:$0xff]
    %v108 = vld [vmem:[#allocation8 + $0x20] sm:$0xff]
    %v109 = vld [vmem:[#allocation8 + $0x28] sm:$0xff]
    %v110 = vld [vmem:[#allocation8 + $0x30] sm:$0xff]
    %v111 = vld [vmem:[#allocation8 + $0x38] sm:$0xff]
    %v112 = vld [vmem:[#allocation8 + $0x40] sm:$0xff]
    %v113 = vld [vmem:[#allocation8 + $0x48] sm:$0xff]
    %v114 = vld [vmem:[#allocation8 + $0x50] sm:$0xff]
    %v115 = vld [vmem:[#allocation8 + $0x58] sm:$0xff]
    %v116 = vld [vmem:[#allocation8 + $0x60] sm:$0xff]
    %v117 = vld [vmem:[#allocation8 + $0x68] sm:$0xff]
    %v118 = vld [vmem:[#allocation8 + $0x70] sm:$0xff]
    %v119 = vld [vmem:[#allocation8 + $0x78] sm:$0xff]
    %120 = vmatpush.msra.mxu0 %v119
    %121 = vmatpush.msra.mxu0 %v118
    %122 = vmatpush.msra.mxu0 %v117
    %123 = vmatpush.msra.mxu0 %v116
    %124 = vmatpush.msra.mxu0 %v115
    %125 = vmatpush.msra.mxu0 %v114
    %126 = vmatpush.msra.mxu0 %v113
    %127 = vmatpush.msra.mxu0 %v112
    %128 = vmatpush.msra.mxu0 %v111
    %129 = vmatpush.msra.mxu0 %v110
    %130 = vmatpush.msra.mxu0 %v109
    %131 = vmatpush.msra.mxu0 %v108
    %132 = vmatpush.msra.mxu0 %v107
    %133 = vmatpush.msra.mxu0 %v106
    %134 = vmatpush.msra.mxu0 %v105
    %135 = vmatpush.msra.mxu0 %v104
    %136 = vmatmul.f32.gmra.mxu0 %v102
    %v137 = vpop.f32.mrf.mxu0
    %v138 = vadd.f32 0.0, %v137
    %139 = vdwg.mxu0
    %v140 = vadd.f32 %v103, %v138
    %141 = vst [vmem:[#allocation2] sm:$0xff] %v140
    // Predicated region
    $region30: #{tpu_custom_call.1} parent=1 // pred_check
      %p142 = pneg %p60
    $region31: #{tpu_custom_call.1} parent=1 // pred_check_branch
      %144 = sbr.rel (%p142) target = $region33
    $region32: #{tpu_custom_call.1} parent=1 // pred_region
      %v145 = vld [vmem:[#allocation2] sm:$0xff]
      %146 = vst [vmem:[#allocation9] sm:$0xff] %v145
    $region33: #{tpu_custom_call.1} parent=1 // pred_fallthru
      _
    // Predicated region
    $region34: #{tpu_custom_call.1} parent=1 // pred_check
      _
    $region35: #{tpu_custom_call.1} parent=1 // pred_check_branch
      %148 = sbr.rel (0) target = $region37
    $region36: #{tpu_custom_call.1} parent=1 // pred_region
      %150 = vsyncadd [#allocation5], 0
      %s152 = sshll.u32 [#allocation9], 4
      %s153 = int_to_ptr.vmem [resolvable:$true] %s152
      %s154 = sshll.u32 %s3, 4
      %s155 = int_to_ptr.hbm [resolvable:$true] %s154
      %157 = dma.vmem_to_hbm [thread:$0]  %s153, 128, %s155, [#allocation5]
    $region37: #{tpu_custom_call.1} parent=1 // pred_fallthru
      _
    // Predicated region
    $region38: #{tpu_custom_call.1} parent=1 // pred_check
      _
    $region39: #{tpu_custom_call.1} parent=1 // pred_check_branch
      %159 = sbr.rel (0) target = $region41
    $region40: #{tpu_custom_call.1} parent=1 // pred_region
      %161 = dma.done [#allocation5], 128
    $region41: #{tpu_custom_call.1} parent=1 // pred_fallthru
      _
    %162 = vsyncpa [#allocation4], 1
    %163 = vsyncpa [#allocation7], 1
    %164 = vsyncpa [#allocation5], 1

</llo_original>
